<compile_context>
chip_gen: v6e
topology: v6e:2x2x1
jax: 0.10.0
libtpu: 0.0.40
codegen_flags: <defaults>
</compile_context>

<pallas_src>
import jax
import jax.numpy as jnp
from jax.experimental import pallas as pl
from jax.experimental.pallas import tpu as pltpu


def _cfg_kernel(scale_sm,                      # scalar-prefetch (SMEM): cond_scale (1,)
                x_ref,                         # (B*C, HW)   latent, lane-dense
                w_ref,                         # (B*C, B*C)  kron(I_B, Wx^T), block-diag
                invs_ref,                      # (B*C, 1)    rsqrt(sigma^2+1) per row
                bu_ref, bc_ref,                # (B*C, 1)    uncond / cond bias columns
                out_ref):                      # (B*C, HW)
    cond_scale = scale_sm[0]

    x = x_ref[...]                             # (8, 256) — one full sublane tile
    w = w_ref[...]                             # (8, 8)
    rows = x.shape[0]

    # Channel mix on the VPU: sum_r  w[:, r] (column)  *  x[r, :] (row),
    # broadcast to (rows, HW).  8 muls + 7 adds on full vregs; no MXU
    # push / result-FIFO latency.  (At much larger C, flip back to a single
    # block-diag MXU dot — re-derive the binding unit per variant.)
    acc = w[:, 0:1] * x[0:1, :]
    for r in range(1, rows):
        acc = acc + w[:, r:r+1] * x[r:r+1, :]

    base = acc * invs_ref[...]                 # (8, 256) * (8, 1)

    # CFG combine: base is shared by both branches, so
    #   u + (c - u) * scale  ==  base + bias_u + (bias_c - bias_u) * scale
    bias_u = bu_ref[...]                       # (8, 1)
    bias_c = bc_ref[...]                       # (8, 1)
    bias = bias_u + (bias_c - bias_u) * cond_scale

    out_ref[...] = (base + bias).astype(out_ref.dtype)   # single unmasked dense store
    # TODO(synk): `normalize_latent` (rescale=True path) is not defined in the
    # reference module, so the rescale branch is not implemented.


@jax.jit
def cfg_denoiser(x_nchw, sigma, uncond, cond, cond_scale, wx, wc):
    """x_nchw: (B, C, H, W) f32; sigma: (B,) f32; uncond/cond: (B, S, CTX) f32;
    cond_scale: () f32; wx: (C, C); wc: (CTX, C)."""
    B, C, H, W = x_nchw.shape
    HW = H * W
    BC = B * C

    # Fold batch into the sublane dim: pure reshape, no transpose. Row order is
    # r = b*C + c, matching all the per-row columns built below.
    x_r = x_nchw.reshape(BC, HW).astype(jnp.float32)                  # (8, 256)

    # Block-diagonal channel-mix weight: w_bd[b*C+co, b*C+ci] = wx[ci, co].
    w_bd = jnp.kron(jnp.eye(B, dtype=jnp.float32), wx.T.astype(jnp.float32))

    # Per-row latent scale, replicated over channels -> (B*C, 1).
    inv_scale = jax.lax.rsqrt(sigma.astype(jnp.float32) ** 2 + 1.0)   # (B,)
    inv_scale = jnp.repeat(inv_scale, C).reshape(BC, 1)

    # Synthetic inner-model context path, hoisted out of the kernel (<2 KiB,
    # fuses into the surrounding XLA graph):  bias_b = mean_S(ctx) @ Wc.
    wc_f = wc.astype(jnp.float32)
    bias_u = (jnp.mean(uncond.astype(jnp.float32), axis=1) @ wc_f).reshape(BC, 1)
    bias_c = (jnp.mean(cond.astype(jnp.float32), axis=1) @ wc_f).reshape(BC, 1)

    scale_arr = jnp.reshape(jnp.asarray(cond_scale, jnp.float32), (1,))

    grid_spec = pltpu.PrefetchScalarGridSpec(
        num_scalar_prefetch=1,                 # cond_scale -> SMEM
        grid=(1,),                             # whole problem in one step
        in_specs=[
            pl.BlockSpec((BC, HW), lambda i, sc: (0, 0)),   # x (8, 256)
            pl.BlockSpec((BC, BC), lambda i, sc: (0, 0)),   # kron(I_B, Wx^T)
            pl.BlockSpec((BC, 1), lambda i, sc: (0, 0)),    # inv_scale
            pl.BlockSpec((BC, 1), lambda i, sc: (0, 0)),    # bias_u
            pl.BlockSpec((BC, 1), lambda i, sc: (0, 0)),    # bias_c
        ],
        out_specs=pl.BlockSpec((BC, HW), lambda i, sc: (0, 0)),
    )

    cost = pl.CostEstimate(
        flops=2 * BC * BC * HW + 4 * BC * HW,
        transcendentals=0,
        bytes_accessed=4 * (2 * BC * HW + BC * BC + 3 * BC),
    )

    out = pl.pallas_call(
        _cfg_kernel,
        out_shape=jax.ShapeDtypeStruct((BC, HW), jnp.float32),
        grid_spec=grid_spec,
        compiler_params=pltpu.CompilerParams(
            dimension_semantics=("arbitrary",)),
        cost_estimate=cost,
    )(scale_arr, x_r, w_bd, inv_scale, bias_u, bias_c)

    return out.reshape(B, C, H, W)


def _reference(x_nchw, sigma, uncond, cond, cond_scale, wx, wc):
    """Pure-JAX reference mirroring the PyTorch forward semantics
    (cat -> synthetic inner model on doubled batch -> chunk -> CFG combine)."""
    x_in = jnp.concatenate([x_nchw] * 2, axis=0)
    sigma_in = jnp.concatenate([sigma] * 2, axis=0)
    cond_in = jnp.concatenate([uncond, cond], axis=0)

    s = 1.0 / jnp.sqrt(sigma_in ** 2 + 1.0)
    base = jnp.einsum("bchw,cd->bdhw", x_in, wx) * s[:, None, None, None]
    bias = jnp.mean(jnp.einsum("bsk,kd->bsd", cond_in, wc), axis=1)    # (2B, C)
    eps = base + bias[:, :, None, None]

    u, c = jnp.split(eps, 2, axis=0)
    return u + (c - u) * cond_scale


if __name__ == "__main__":
    key = jax.random.PRNGKey(0)
    kx, ks, ku, kc, kwx, kwc = jax.random.split(key, 6)

    B, C, H, W = 2, 4, 16, 16
    S, CTX = 8, 32

    x = jax.random.normal(kx, (B, C, H, W), dtype=jnp.float32)
    sigma = jax.random.uniform(ks, (B,), dtype=jnp.float32, minval=0.5, maxval=5.0)
    uncond = jax.random.normal(ku, (B, S, CTX), dtype=jnp.float32)
    cond = jax.random.normal(kc, (B, S, CTX), dtype=jnp.float32)
    cond_scale = jnp.float32(7.5)

    # Deterministic synthetic inner-model parameters.
    wx = jax.random.normal(kwx, (C, C), dtype=jnp.float32) * 0.2
    wc = jax.random.normal(kwc, (CTX, C), dtype=jnp.float32) * 0.1

    out = cfg_denoiser(x, sigma, uncond, cond, cond_scale, wx, wc)
    out = jax.block_until_ready(out)

    ref = _reference(x, sigma, uncond, cond, cond_scale, wx, wc)
    assert out.shape == (B, C, H, W)
    assert jnp.allclose(out, ref, atol=1e-4, rtol=1e-4)

    print("KERNEL_OK")
</pallas_src>

<mosaic_0001>
module attributes {stable_mosaic.version = 11 : i64} {
  func.func @_cfg_kernel(%arg0: i32, %arg1: memref<1xf32, #tpu.memory_space<smem>>, %arg2: memref<8x256xf32, #tpu.memory_space<vmem>>, %arg3: memref<8x8xf32, #tpu.memory_space<vmem>>, %arg4: memref<8x1xf32, #tpu.memory_space<vmem>>, %arg5: memref<8x1xf32, #tpu.memory_space<vmem>>, %arg6: memref<8x1xf32, #tpu.memory_space<vmem>>, %arg7: memref<8x256xf32, #tpu.memory_space<vmem>>) attributes {dimension_semantics = [#tpu.dimension_semantics<arbitrary>], iteration_bounds = array<i64: 1>, scalar_prefetch = 1 : i64, scratch_operands = 0 : i64, tpu.core_type = #tpu.core_type<tc>, window_params = [{pipeline_mode = #tpu.pipeline_mode<synchronous>, transform_indices = @transform_0, window_bounds = array<i64: 8, 256>}, {pipeline_mode = #tpu.pipeline_mode<synchronous>, transform_indices = @transform_1, window_bounds = array<i64: 8, 8>}, {pipeline_mode = #tpu.pipeline_mode<synchronous>, transform_indices = @transform_2, window_bounds = array<i64: 8, 1>}, {pipeline_mode = #tpu.pipeline_mode<synchronous>, transform_indices = @transform_3, window_bounds = array<i64: 8, 1>}, {pipeline_mode = #tpu.pipeline_mode<synchronous>, transform_indices = @transform_4, window_bounds = array<i64: 8, 1>}, {pipeline_mode = #tpu.pipeline_mode<synchronous>, transform_indices = @transform_5, window_bounds = array<i64: 8, 256>}]} {
    %c0 = arith.constant 0 : index
    %0 = memref.load %arg1[%c0] : memref<1xf32, #tpu.memory_space<smem>>
    %c0_0 = arith.constant 0 : index
    %c0_1 = arith.constant 0 : index
    %1 = vector.load %arg2[%c0_0, %c0_1] : memref<8x256xf32, #tpu.memory_space<vmem>>, vector<8x256xf32>
    %c0_2 = arith.constant 0 : index
    %c0_3 = arith.constant 0 : index
    %2 = vector.load %arg3[%c0_2, %c0_3] : memref<8x8xf32, #tpu.memory_space<vmem>>, vector<8x8xf32>
    %3 = vector.extract_strided_slice %2 {offsets = [0, 0], sizes = [8, 1], strides = [1, 1]} : vector<8x8xf32> to vector<8x1xf32>
    %4 = vector.extract_strided_slice %1 {offsets = [0, 0], sizes = [1, 256], strides = [1, 1]} : vector<8x256xf32> to vector<1x256xf32>
    %5 = vector.broadcast %3 : vector<8x1xf32> to vector<8x256xf32>
    %6 = vector.broadcast %4 : vector<1x256xf32> to vector<8x256xf32>
    %7 = arith.mulf %5, %6 : vector<8x256xf32>
    %8 = vector.extract_strided_slice %2 {offsets = [0, 1], sizes = [8, 1], strides = [1, 1]} : vector<8x8xf32> to vector<8x1xf32>
    %9 = vector.extract_strided_slice %1 {offsets = [1, 0], sizes = [1, 256], strides = [1, 1]} : vector<8x256xf32> to vector<1x256xf32>
    %10 = vector.broadcast %8 : vector<8x1xf32> to vector<8x256xf32>
    %11 = vector.broadcast %9 : vector<1x256xf32> to vector<8x256xf32>
    %12 = arith.mulf %10, %11 : vector<8x256xf32>
    %13 = arith.addf %7, %12 : vector<8x256xf32>
    %14 = vector.extract_strided_slice %2 {offsets = [0, 2], sizes = [8, 1], strides = [1, 1]} : vector<8x8xf32> to vector<8x1xf32>
    %15 = vector.extract_strided_slice %1 {offsets = [2, 0], sizes = [1, 256], strides = [1, 1]} : vector<8x256xf32> to vector<1x256xf32>
    %16 = vector.broadcast %14 : vector<8x1xf32> to vector<8x256xf32>
    %17 = vector.broadcast %15 : vector<1x256xf32> to vector<8x256xf32>
    %18 = arith.mulf %16, %17 : vector<8x256xf32>
    %19 = arith.addf %13, %18 : vector<8x256xf32>
    %20 = vector.extract_strided_slice %2 {offsets = [0, 3], sizes = [8, 1], strides = [1, 1]} : vector<8x8xf32> to vector<8x1xf32>
    %21 = vector.extract_strided_slice %1 {offsets = [3, 0], sizes = [1, 256], strides = [1, 1]} : vector<8x256xf32> to vector<1x256xf32>
    %22 = vector.broadcast %20 : vector<8x1xf32> to vector<8x256xf32>
    %23 = vector.broadcast %21 : vector<1x256xf32> to vector<8x256xf32>
    %24 = arith.mulf %22, %23 : vector<8x256xf32>
    %25 = arith.addf %19, %24 : vector<8x256xf32>
    %26 = vector.extract_strided_slice %2 {offsets = [0, 4], sizes = [8, 1], strides = [1, 1]} : vector<8x8xf32> to vector<8x1xf32>
    %27 = vector.extract_strided_slice %1 {offsets = [4, 0], sizes = [1, 256], strides = [1, 1]} : vector<8x256xf32> to vector<1x256xf32>
    %28 = vector.broadcast %26 : vector<8x1xf32> to vector<8x256xf32>
    %29 = vector.broadcast %27 : vector<1x256xf32> to vector<8x256xf32>
    %30 = arith.mulf %28, %29 : vector<8x256xf32>
    %31 = arith.addf %25, %30 : vector<8x256xf32>
    %32 = vector.extract_strided_slice %2 {offsets = [0, 5], sizes = [8, 1], strides = [1, 1]} : vector<8x8xf32> to vector<8x1xf32>
    %33 = vector.extract_strided_slice %1 {offsets = [5, 0], sizes = [1, 256], strides = [1, 1]} : vector<8x256xf32> to vector<1x256xf32>
    %34 = vector.broadcast %32 : vector<8x1xf32> to vector<8x256xf32>
    %35 = vector.broadcast %33 : vector<1x256xf32> to vector<8x256xf32>
    %36 = arith.mulf %34, %35 : vector<8x256xf32>
    %37 = arith.addf %31, %36 : vector<8x256xf32>
    %38 = vector.extract_strided_slice %2 {offsets = [0, 6], sizes = [8, 1], strides = [1, 1]} : vector<8x8xf32> to vector<8x1xf32>
    %39 = vector.extract_strided_slice %1 {offsets = [6, 0], sizes = [1, 256], strides = [1, 1]} : vector<8x256xf32> to vector<1x256xf32>
    %40 = vector.broadcast %38 : vector<8x1xf32> to vector<8x256xf32>
    %41 = vector.broadcast %39 : vector<1x256xf32> to vector<8x256xf32>
    %42 = arith.mulf %40, %41 : vector<8x256xf32>
    %43 = arith.addf %37, %42 : vector<8x256xf32>
    %44 = vector.extract_strided_slice %2 {offsets = [0, 7], sizes = [8, 1], strides = [1, 1]} : vector<8x8xf32> to vector<8x1xf32>
    %45 = vector.extract_strided_slice %1 {offsets = [7, 0], sizes = [1, 256], strides = [1, 1]} : vector<8x256xf32> to vector<1x256xf32>
    %46 = vector.broadcast %44 : vector<8x1xf32> to vector<8x256xf32>
    %47 = vector.broadcast %45 : vector<1x256xf32> to vector<8x256xf32>
    %48 = arith.mulf %46, %47 : vector<8x256xf32>
    %49 = arith.addf %43, %48 : vector<8x256xf32>
    %c0_4 = arith.constant 0 : index
    %c0_5 = arith.constant 0 : index
    %50 = vector.load %arg4[%c0_4, %c0_5] : memref<8x1xf32, #tpu.memory_space<vmem>>, vector<8x1xf32>
    %51 = vector.broadcast %50 : vector<8x1xf32> to vector<8x256xf32>
    %52 = arith.mulf %49, %51 : vector<8x256xf32>
    %c0_6 = arith.constant 0 : index
    %c0_7 = arith.constant 0 : index
    %53 = vector.load %arg5[%c0_6, %c0_7] : memref<8x1xf32, #tpu.memory_space<vmem>>, vector<8x1xf32>
    %c0_8 = arith.constant 0 : index
    %c0_9 = arith.constant 0 : index
    %54 = vector.load %arg6[%c0_8, %c0_9] : memref<8x1xf32, #tpu.memory_space<vmem>>, vector<8x1xf32>
    %55 = arith.subf %54, %53 : vector<8x1xf32>
    %56 = vector.broadcast %0 : f32 to vector<8x1xf32>
    %57 = arith.mulf %55, %56 : vector<8x1xf32>
    %58 = arith.addf %53, %57 : vector<8x1xf32>
    %59 = vector.broadcast %58 : vector<8x1xf32> to vector<8x256xf32>
    %60 = arith.addf %52, %59 : vector<8x256xf32>
    %c0_10 = arith.constant 0 : index
    %c0_11 = arith.constant 0 : index
    %61 = vector.load %arg7[%c0_10, %c0_11] : memref<8x256xf32, #tpu.memory_space<vmem>>, vector<8x256xf32>
    tpu.vector_store %arg7[%c0_10, %c0_11], %60 {strides = array<i32>} : memref<8x256xf32, #tpu.memory_space<vmem>>, vector<8x256xf32>,
    return
  }
  func.func @transform_0(%arg0: i32, %arg1: memref<1xf32, #tpu.memory_space<smem>>) -> (i32, i32) {
    %c0_i32 = arith.constant 0 : i32
    %c0_i32_0 = arith.constant 0 : i32
    %c0_i32_1 = arith.constant 0 : i32
    return %c0_i32, %c0_i32_0 : i32, i32
  }
  func.func @transform_1(%arg0: i32, %arg1: memref<1xf32, #tpu.memory_space<smem>>) -> (i32, i32) {
    %c0_i32 = arith.constant 0 : i32
    %c0_i32_0 = arith.constant 0 : i32
    %c0_i32_1 = arith.constant 0 : i32
    return %c0_i32, %c0_i32_0 : i32, i32
  }
  func.func @transform_2(%arg0: i32, %arg1: memref<1xf32, #tpu.memory_space<smem>>) -> (i32, i32) {
    %c0_i32 = arith.constant 0 : i32
    %c0_i32_0 = arith.constant 0 : i32
    %c0_i32_1 = arith.constant 0 : i32
    return %c0_i32, %c0_i32_0 : i32, i32
  }
  func.func @transform_3(%arg0: i32, %arg1: memref<1xf32, #tpu.memory_space<smem>>) -> (i32, i32) {
    %c0_i32 = arith.constant 0 : i32
    %c0_i32_0 = arith.constant 0 : i32
    %c0_i32_1 = arith.constant 0 : i32
    return %c0_i32, %c0_i32_0 : i32, i32
  }
  func.func @transform_4(%arg0: i32, %arg1: memref<1xf32, #tpu.memory_space<smem>>) -> (i32, i32) {
    %c0_i32 = arith.constant 0 : i32
    %c0_i32_0 = arith.constant 0 : i32
    %c0_i32_1 = arith.constant 0 : i32
    return %c0_i32, %c0_i32_0 : i32, i32
  }
  func.func @transform_5(%arg0: i32, %arg1: memref<1xf32, #tpu.memory_space<smem>>) -> (i32, i32) {
    %c0_i32 = arith.constant 0 : i32
    %c0_i32_0 = arith.constant 0 : i32
    %c0_i32_1 = arith.constant 0 : i32
    return %c0_i32, %c0_i32_0 : i32, i32
  }
}

</mosaic_0001>

<llo_original>
// kernel: cfg_denoiser.1
$region0: #{cfg_denoiser.1}
  #allocation0 [shape = 'u32[]', space=smem, size = 0x4, offset = 0x4, fixed_abs, tag = 'smem constant byte address 0x4 - core index']
  #allocation1 [shape = 'u32[144,128]{1,0:T(1,128)}', space=vmem, size = 0x12000, scoped, tag = 'internal scratch']
  #allocation2 [shape = 's32[1]{0}', space=sflag, size = 0x4, scoped, tag = 'scoped memory for cfg_denoiser.1']
  #allocation3 [shape = 'f32[1]{0:T(128)S(6)}', space=smem, size = 0x200, scoped, tag = 'prefetched SMEM operand 0']
  %s0 = inlined_call_operand.<no memory space> [shape: f32[1], index: 0, kind: input, shape index: {}]
  %s1 = inlined_call_operand.vmem [shape: f32[8,256], index: 1, kind: input, shape index: {}]
  %s2 = inlined_call_operand.vmem [shape: f32[8,8], index: 2, kind: input, shape index: {}]
  %s3 = inlined_call_operand.vmem [shape: f32[8,1], index: 3, kind: input, shape index: {}]
  %s4 = inlined_call_operand.vmem [shape: f32[8,1], index: 4, kind: input, shape index: {}]
  %s5 = inlined_call_operand.vmem [shape: f32[8,1], index: 5, kind: input, shape index: {}]
  %s6 = inlined_call_operand.vmem [shape: f32[8,256], index: 6, kind: output, shape index: {}]
  %s7 = sld [smem:[#allocation0]]
  $region30: #{cfg_denoiser.1} parent=0
    _
  %s9 = ssub.s32 1, %s7
  %s10 = scalar_select 0, %s9, %s7
  %11 = sst [smem:[#allocation3]] %s0
  // Predicated region
  $region2: #{cfg_denoiser.1} parent=0 // pred_check
    _
  $region3: #{cfg_denoiser.1} parent=0 // pred_check_branch
    %13 = sbr.rel (0) target = $region5
  $region4: #{cfg_denoiser.1} parent=0 // pred_region
    _
  $region5: #{cfg_denoiser.1} parent=0 // pred_fallthru
    _
  // Predicated region
  $region6: #{cfg_denoiser.1} parent=0 // pred_check
    _
  $region7: #{cfg_denoiser.1} parent=0 // pred_check_branch
    %15 = sbr.rel (0) target = $region9
  $region8: #{cfg_denoiser.1} parent=0 // pred_region
    _
  $region9: #{cfg_denoiser.1} parent=0 // pred_fallthru
    _
  // Predicated region
  $region10: #{cfg_denoiser.1} parent=0 // pred_check
    _
  $region11: #{cfg_denoiser.1} parent=0 // pred_check_branch
    %17 = sbr.rel (0) target = $region13
  $region12: #{cfg_denoiser.1} parent=0 // pred_region
    _
  $region13: #{cfg_denoiser.1} parent=0 // pred_fallthru
    _
  // Predicated region
  $region14: #{cfg_denoiser.1} parent=0 // pred_check
    _
  $region15: #{cfg_denoiser.1} parent=0 // pred_check_branch
    %19 = sbr.rel (0) target = $region17
  $region16: #{cfg_denoiser.1} parent=0 // pred_region
    _
  $region17: #{cfg_denoiser.1} parent=0 // pred_fallthru
    _
  // Predicated region
  $region18: #{cfg_denoiser.1} parent=0 // pred_check
    _
  $region19: #{cfg_denoiser.1} parent=0 // pred_check_branch
    %21 = sbr.rel (0) target = $region21
  $region20: #{cfg_denoiser.1} parent=0 // pred_region
    _
  $region21: #{cfg_denoiser.1} parent=0 // pred_fallthru
    _
  %s22 = sld [smem:[#allocation3]]
  %v23 = vld [vmem:[%s1] sm:$0xff]
  %v24 = vld [vmem:[%s1 + $0x8] sm:$0xff]
  %v25 = vld [vmem:[%s2] sm:$0xff]
  %27 = vset.pattern.permute.xlu0 0
  %28 = vperm.xlu0 %27, %v25
  %v29 = vpop.permute.xlu0 %28
  %v31 = vlaneseq
  %v32 = vshrl.u32 %v31, 7
  %v33 = vsub.s32 0, %v32
  %v34 = vrot.slane %v23, %v33
  %v35 = vlaneseq
  %v36 = vshrl.u32 %v35, 7
  %v37 = vsub.s32 0, %v36
  %v38 = vrot.slane %v24, %v37
  %v39 = vmul.f32 %v29, %v34
  %v40 = vmul.f32 %v29, %v38
  %41 = vset.pattern.permute.xlu0 1
  %42 = vperm.xlu0 %41, %v25
  %v43 = vpop.permute.xlu0 %42
  %v45 = vlaneseq
  %v46 = vshrl.u32 %v45, 7
  %v47 = vsub.s32 1, %v46
  %v48 = vrot.slane %v23, %v47
  %v49 = vlaneseq
  %v50 = vshrl.u32 %v49, 7
  %v51 = vsub.s32 1, %v50
  %v52 = vrot.slane %v24, %v51
  %v53 = vmul.f32 %v43, %v48
  %v54 = vmul.f32 %v43, %v52
  %v55 = vadd.f32 %v39, %v53
  %v56 = vadd.f32 %v40, %v54
  %57 = vset.pattern.permute.xlu0 2
  %58 = vperm.xlu0 %57, %v25
  %v59 = vpop.permute.xlu0 %58
  %v61 = vlaneseq
  %v62 = vshrl.u32 %v61, 7
  %v63 = vsub.s32 2, %v62
  %v64 = vrot.slane %v23, %v63
  %v65 = vlaneseq
  %v66 = vshrl.u32 %v65, 7
  %v67 = vsub.s32 2, %v66
  %v68 = vrot.slane %v24, %v67
  %v69 = vmul.f32 %v59, %v64
  %v70 = vmul.f32 %v59, %v68
  %v71 = vadd.f32 %v55, %v69
  %v72 = vadd.f32 %v56, %v70
  %73 = vset.pattern.permute.xlu0 3
  %74 = vperm.xlu0 %73, %v25
  %v75 = vpop.permute.xlu0 %74
  %v77 = vlaneseq
  %v78 = vshrl.u32 %v77, 7
  %v79 = vsub.s32 3, %v78
  %v80 = vrot.slane %v23, %v79
  %v81 = vlaneseq
  %v82 = vshrl.u32 %v81, 7
  %v83 = vsub.s32 3, %v82
  %v84 = vrot.slane %v24, %v83
  %v85 = vmul.f32 %v75, %v80
  %v86 = vmul.f32 %v75, %v84
  %v87 = vadd.f32 %v71, %v85
  %v88 = vadd.f32 %v72, %v86
  %89 = vset.pattern.permute.xlu0 4
  %90 = vperm.xlu0 %89, %v25
  %v91 = vpop.permute.xlu0 %90
  %v93 = vlaneseq
  %v94 = vshrl.u32 %v93, 7
  %v95 = vsub.s32 4, %v94
  %v96 = vrot.slane %v23, %v95
  %v97 = vlaneseq
  %v98 = vshrl.u32 %v97, 7
  %v99 = vsub.s32 4, %v98
  %v100 = vrot.slane %v24, %v99
  %v101 = vmul.f32 %v91, %v96
  %v102 = vmul.f32 %v91, %v100
  %v103 = vadd.f32 %v87, %v101
  %v104 = vadd.f32 %v88, %v102
  %105 = vset.pattern.permute.xlu0 5
  %106 = vperm.xlu0 %105, %v25
  %v107 = vpop.permute.xlu0 %106
  %v109 = vlaneseq
  %v110 = vshrl.u32 %v109, 7
  %v111 = vsub.s32 5, %v110
  %v112 = vrot.slane %v23, %v111
  %v113 = vlaneseq
  %v114 = vshrl.u32 %v113, 7
  %v115 = vsub.s32 5, %v114
  %v116 = vrot.slane %v24, %v115
  %v117 = vmul.f32 %v107, %v112
  %v118 = vmul.f32 %v107, %v116
  %v119 = vadd.f32 %v103, %v117
  %v120 = vadd.f32 %v104, %v118
  %121 = vset.pattern.permute.xlu0 6
  %122 = vperm.xlu0 %121, %v25
  %v123 = vpop.permute.xlu0 %122
  %v125 = vlaneseq
  %v126 = vshrl.u32 %v125, 7
  %v127 = vsub.s32 6, %v126
  %v128 = vrot.slane %v23, %v127
  %v129 = vlaneseq
  %v130 = vshrl.u32 %v129, 7
  %v131 = vsub.s32 6, %v130
  %v132 = vrot.slane %v24, %v131
  %v133 = vmul.f32 %v123, %v128
  %v134 = vmul.f32 %v123, %v132
  %v135 = vadd.f32 %v119, %v133
  %v136 = vadd.f32 %v120, %v134
  %137 = vset.pattern.permute.xlu0 7
  %138 = vperm.xlu0 %137, %v25
  %v139 = vpop.permute.xlu0 %138
  %v141 = vlaneseq
  %v142 = vshrl.u32 %v141, 7
  %v143 = vsub.s32 7, %v142
  %v144 = vrot.slane %v23, %v143
  %v145 = vlaneseq
  %v146 = vshrl.u32 %v145, 7
  %v147 = vsub.s32 7, %v146
  %v148 = vrot.slane %v24, %v147
  %v149 = vmul.f32 %v139, %v144
  %v150 = vmul.f32 %v139, %v148
  %v151 = vadd.f32 %v135, %v149
  %v152 = vadd.f32 %v136, %v150
  %v153 = vld [vmem:[%s3] sm:$0xff]
  %155 = vset.pattern.permute.xlu0 0
  %156 = vperm.xlu0 %155, %v153
  %v157 = vpop.permute.xlu0 %156
  %v159 = vmul.f32 %v151, %v157
  %v160 = vmul.f32 %v152, %v157
  %v161 = vld [vmem:[%s4] sm:$0xff]
  %v162 = vld [vmem:[%s5] sm:$0xff]
  %v163 = vsub.f32 %v162, %v161
  %v164 = vstv %s22
  %v165 = vmul.f32 %v163, %v164
  %v166 = vadd.f32 %v161, %v165
  %168 = vset.pattern.permute.xlu0 0
  %169 = vperm.xlu0 %168, %v166
  %v170 = vpop.permute.xlu0 %169
  %v172 = vadd.f32 %v159, %v170
  %v173 = vadd.f32 %v160, %v170
  %174 = vst [vmem:[%s6] sm:$0xff] %v172
  %175 = vst [vmem:[%s6 + $0x8] sm:$0xff] %v173
  // Predicated region
  $region22: #{cfg_denoiser.1} parent=0 // pred_check
    _
  $region23: #{cfg_denoiser.1} parent=0 // pred_check_branch
    %177 = sbr.rel (0) target = $region25
  $region24: #{cfg_denoiser.1} parent=0 // pred_region
    _
  $region25: #{cfg_denoiser.1} parent=0 // pred_fallthru
    _
  // Predicated region
  $region26: #{cfg_denoiser.1} parent=0 // pred_check
    _
  $region27: #{cfg_denoiser.1} parent=0 // pred_check_branch
    %179 = sbr.rel (0) target = $region29
  $region28: #{cfg_denoiser.1} parent=0 // pred_region
    _
  $region29: #{cfg_denoiser.1} parent=0 // pred_fallthru
    _

</llo_original>
